<compile_context>
chip_gen: v6e
topology: v6e:2x2x1
jax: 0.10.0
libtpu: 0.0.40
codegen_flags: <defaults>
</compile_context>

<pallas_src>
import functools

import jax
import jax.numpy as jnp
from jax.experimental import pallas as pl
from jax.experimental.pallas import tpu as pltpu


def _resnet_block_kernel(xm_ref, xh_ref, w1_ref, b1_ref, wc_ref, bc_ref,
                         o_ref, stk3_ref, stk2_ref, *, dilation, tt):
    """One (batch, time-tile) grid step.

    xm_ref  : (1, C, tt)      bf16, aligned tile of the reflection-padded input
    xh_ref  : (1, 1, C, 2d)   bf16, halo = first 2d columns of the next tile
    w1_ref  : (C, 3C)         bf16, k=3 dilated conv packed as [out, tap*C+in]
    b1_ref  : (C, 1)          f32
    wc_ref  : (C, 2C)         bf16, [Ws | W2] (shortcut 1x1 | final 1x1)
    bc_ref  : (C, 1)          f32, bs + b2
    o_ref   : (1, C, tt)
    stk3_ref: (3C, tt) f32 scratch — stacked LeakyReLU'd tap windows
    stk2_ref: (2C, tt) f32 scratch — stacked [x ; h2]
    """
    d = dilation
    C = o_ref.shape[1]

    main = xm_ref[0].astype(jnp.float32)       # (C, tt)   upcast for VPU (v5e)
    halo = xh_ref[0, 0].astype(jnp.float32)    # (C, 2d)

    def lrelu(v):
        return jnp.where(v > 0, v, 0.2 * v)

    # ---- build the (3C, tt) stack of shifted, LeakyReLU'd tap windows ----
    # Window for tap k is columns [k*d, k*d + tt) of [main | halo]; all lane
    # offsets are static.
    for k in range(3):
        off = k * d
        rows = slice(k * C, (k + 1) * C)
        stk3_ref[rows, 0:tt - off] = lrelu(main[:, off:tt])
        if off > 0:
            stk3_ref[rows, tt - off:tt] = lrelu(halo[:, 0:off])

    # k=3 dilated conv as a single K=3C MXU matmul (bf16 in, f32 accumulate),
    # bias added after the matmul (no broadcast materialized up front).
    acc = jnp.dot(w1_ref[...], stk3_ref[...].astype(jnp.bfloat16),
                  preferred_element_type=jnp.float32) + b1_ref[...]
    h2 = lrelu(acc)

    # ---- stack [x ; h2]: fused shortcut 1x1 + final 1x1 in one matmul ----
    # x (pre-activation) is the tap-1 window of the padded input.
    stk2_ref[0:C, 0:tt - d] = main[:, d:tt]
    stk2_ref[0:C, tt - d:tt] = halo[:, 0:d]
    stk2_ref[C:2 * C, :] = h2

    out = jnp.dot(wc_ref[...], stk2_ref[...].astype(jnp.bfloat16),
                  preferred_element_type=jnp.float32) + bc_ref[...]
    o_ref[0] = out.astype(o_ref.dtype)


def _weight_norm(v, g):
    """PyTorch weight_norm on Conv1d: w = g * v / ||v|| over dims (1,2)."""
    norm = jnp.sqrt(jnp.sum(v * v, axis=(1, 2), keepdims=True))
    return g * v / norm


def resnet_block_forward(x, params, dilation=1, tt=128):
    """x: (B, C, T) float32.  params: dict of raw weight-norm params."""
    B, C, T = x.shape
    d = dilation
    assert 1 <= d < T, "ReflectionPad1d requires dilation < T"
    assert 2 * d <= tt, "time tile must cover the 2*dilation halo"
    assert tt % 128 == 0, "time tile must be lane-aligned"

    nt = pl.cdiv(T, tt)
    t_pad = nt * tt

    # ---- resolve weight-norm + pack weights (glue; tiny) ----
    w1 = _weight_norm(params["conv1_v"], params["conv1_g"])           # (C, C, 3)
    w2 = _weight_norm(params["conv2_v"], params["conv2_g"])[:, :, 0]  # (C, C)
    ws = _weight_norm(params["convs_v"], params["convs_g"])[:, :, 0]  # (C, C)
    # [out, tap*C + in] so the dilated conv is one K=3C matmul vs the tap stack.
    w1p = jnp.transpose(w1, (0, 2, 1)).reshape(C, 3 * C).astype(jnp.bfloat16)
    # [Ws | W2] so shortcut-1x1 and final-1x1 fuse into one K=2C matmul.
    wc = jnp.concatenate([ws, w2], axis=1).astype(jnp.bfloat16)       # (C, 2C)
    b1 = params["conv1_b"].reshape(C, 1).astype(jnp.float32)
    bc = (params["convs_b"] + params["conv2_b"]).reshape(C, 1).astype(jnp.float32)

    # ---- reflection pad (cheap gather in glue) + zero pad to whole tiles ----
    xp = jnp.pad(x, ((0, 0), (0, 0), (d, d)), mode="reflect")          # (B,C,T+2d)
    xp = jnp.pad(xp, ((0, 0), (0, 0), (0, t_pad - T)))                 # (B,C,t_pad+2d)

    x_main = xp[:, :, :t_pad].astype(jnp.bfloat16)                     # (B, C, t_pad)
    # halo[b, j] = columns [(j+1)*tt, (j+1)*tt + 2d) of xp  -> (B, nt, C, 2d)
    cols = (jnp.arange(nt)[:, None] + 1) * tt + jnp.arange(2 * d)[None, :]
    halo = jnp.transpose(xp[:, :, cols], (0, 2, 1, 3)).astype(jnp.bfloat16)

    kernel = functools.partial(_resnet_block_kernel, dilation=d, tt=tt)

    # Explicit VMEM budget: double-buffered blocks + scratch stacks + f32 temps,
    # with headroom, capped so the same tiling also fits v7x's 64 MiB VMEM.
    block_bytes = (
        2 * (C * tt * 2)                                   # x_main tile (bf16) x2 bufs
        + 2 * (C * 2 * d * 2)                              # halo tile
        + 2 * (C * 3 * C * 2 + C * 2 * C * 2 + 2 * C * 4)  # weights + biases
        + 2 * (C * tt * 4)                                 # output tile (f32)
        + 5 * C * tt * 4                                   # (3C,tt)+(2C,tt) scratch
        + 8 * C * tt * 4                                   # f32 temporaries headroom
    )
    vmem_limit = int(min(64 * 2**20, max(4 * 2**20, 2 * block_bytes)))

    # Note: for very small C (<64) several batch elements could be packed per
    # grid step to amortize the ~0.35us/step overhead; not needed here.
    out = pl.pallas_call(
        kernel,
        out_shape=jax.ShapeDtypeStruct((B, C, t_pad), x.dtype),
        grid_spec=pltpu.PrefetchScalarGridSpec(
            num_scalar_prefetch=0,
            grid=(B, nt),
            in_specs=[
                pl.BlockSpec((1, C, tt), lambda b, j: (b, 0, j)),           # x_main
                pl.BlockSpec((1, 1, C, 2 * d), lambda b, j: (b, j, 0, 0)),  # halo
                pl.BlockSpec((C, 3 * C), lambda b, j: (0, 0)),              # w1 packed
                pl.BlockSpec((C, 1), lambda b, j: (0, 0)),                  # b1
                pl.BlockSpec((C, 2 * C), lambda b, j: (0, 0)),              # [Ws|W2]
                pl.BlockSpec((C, 1), lambda b, j: (0, 0)),                  # bs + b2
            ],
            out_specs=pl.BlockSpec((1, C, tt), lambda b, j: (b, 0, j)),
            scratch_shapes=[
                pltpu.VMEM((3 * C, tt), jnp.float32),
                pltpu.VMEM((2 * C, tt), jnp.float32),
            ],
        ),
        compiler_params=pltpu.CompilerParams(
            dimension_semantics=("parallel", "parallel"),
            vmem_limit_bytes=vmem_limit),
    )(x_main, halo, w1p, b1, wc, bc)

    return out[:, :, :T]


def _reference_forward(x, params, dilation=1):
    """Pure-JAX f32 reference for a correctness check."""
    d = dilation
    w1 = _weight_norm(params["conv1_v"], params["conv1_g"])
    w2 = _weight_norm(params["conv2_v"], params["conv2_g"])
    ws = _weight_norm(params["convs_v"], params["convs_g"])

    def conv1d(inp, w, b, dil):
        out = jax.lax.conv_general_dilated(
            inp, w, window_strides=(1,), padding="VALID",
            rhs_dilation=(dil,),
            dimension_numbers=("NCH", "OIH", "NCH"))
        return out + b[None, :, None]

    lrelu = lambda v: jnp.where(v > 0, v, 0.2 * v)

    sc = conv1d(x, ws, params["convs_b"], 1)
    h = lrelu(x)
    h = jnp.pad(h, ((0, 0), (0, 0), (d, d)), mode="reflect")
    h = conv1d(h, w1, params["conv1_b"], d)
    h = lrelu(h)
    h = conv1d(h, w2, params["conv2_b"], 1)
    return sc + h


def make_params(key, dim):
    """Deterministic synthetic parameters matching the module's shapes."""
    ks = jax.random.split(key, 6)
    params = {
        "conv1_v": jax.random.normal(ks[0], (dim, dim, 3), jnp.float32) * 0.1,
        "conv1_b": jax.random.normal(ks[1], (dim,), jnp.float32) * 0.1,
        "conv2_v": jax.random.normal(ks[2], (dim, dim, 1), jnp.float32) * 0.1,
        "conv2_b": jax.random.normal(ks[3], (dim,), jnp.float32) * 0.1,
        "convs_v": jax.random.normal(ks[4], (dim, dim, 1), jnp.float32) * 0.1,
        "convs_b": jax.random.normal(ks[5], (dim,), jnp.float32) * 0.1,
    }
    # weight_norm g: ||v|| at init (PyTorch makes w == v), perturbed slightly so
    # the g/||v|| rescaling is actually exercised.
    for name in ("conv1", "conv2", "convs"):
        v = params[name + "_v"]
        norm = jnp.sqrt(jnp.sum(v * v, axis=(1, 2), keepdims=True))
        params[name + "_g"] = norm * 1.05
    return params


if __name__ == "__main__":
    B, C, T = 2, 16, 256       # small but lane-aligned: 2 time tiles of 128
    dilation = 3

    key = jax.random.PRNGKey(0)
    kx, kp = jax.random.split(key)
    x = jax.random.normal(kx, (B, C, T), jnp.float32)
    params = make_params(kp, C)

    out = resnet_block_forward(x, params, dilation=dilation, tt=128)
    out = jax.block_until_ready(out)

    ref = _reference_forward(x, params, dilation=dilation)
    assert out.shape == (B, C, T)
    assert bool(jnp.all(jnp.isfinite(out)))
    # bf16 matmul operands (f32 accumulate) -> relaxed tolerance vs f32 reference.
    assert jnp.allclose(out, ref, atol=5e-2, rtol=5e-2), "mismatch vs reference"

    print("KERNEL_OK")
</pallas_src>

<mosaic_0001>
module attributes {stable_mosaic.version = 11 : i64} {
  func.func @_resnet_block_kernel(%arg0: i32, %arg1: i32, %arg2: memref<1x16x128xbf16, #tpu.memory_space<vmem>>, %arg3: memref<1x1x16x6xbf16, #tpu.memory_space<vmem>>, %arg4: memref<16x48xbf16, #tpu.memory_space<vmem>>, %arg5: memref<16x1xf32, #tpu.memory_space<vmem>>, %arg6: memref<16x32xbf16, #tpu.memory_space<vmem>>, %arg7: memref<16x1xf32, #tpu.memory_space<vmem>>, %arg8: memref<1x16x128xf32, #tpu.memory_space<vmem>>, %arg9: memref<48x128xf32, #tpu.memory_space<vmem>>, %arg10: memref<32x128xf32, #tpu.memory_space<vmem>>) attributes {dimension_semantics = [#tpu.dimension_semantics<parallel>, #tpu.dimension_semantics<parallel>], iteration_bounds = array<i64: 2, 2>, scalar_prefetch = 0 : i64, scratch_operands = 2 : i64, tpu.core_type = #tpu.core_type<tc>, window_params = [{transform_indices = @transform_0, window_bounds = array<i64: 1, 16, 128>}, {transform_indices = @transform_1, window_bounds = array<i64: 1, 1, 16, 6>}, {pipeline_mode = #tpu.pipeline_mode<synchronous>, transform_indices = @transform_2, window_bounds = array<i64: 16, 48>}, {pipeline_mode = #tpu.pipeline_mode<synchronous>, transform_indices = @transform_3, window_bounds = array<i64: 16, 1>}, {pipeline_mode = #tpu.pipeline_mode<synchronous>, transform_indices = @transform_4, window_bounds = array<i64: 16, 32>}, {pipeline_mode = #tpu.pipeline_mode<synchronous>, transform_indices = @transform_5, window_bounds = array<i64: 16, 1>}, {transform_indices = @transform_6, window_bounds = array<i64: 1, 16, 128>}]} {
    %c0 = arith.constant 0 : index
    %c0_0 = arith.constant 0 : index
    %c0_1 = arith.constant 0 : index
    %0 = vector.load %arg2[%c0, %c0_0, %c0_1] : memref<1x16x128xbf16, #tpu.memory_space<vmem>>, vector<1x16x128xbf16>
    %1 = vector.shape_cast %0 : vector<1x16x128xbf16> to vector<16x128xbf16>
    %2 = arith.extf %1 : vector<16x128xbf16> to vector<16x128xf32>
    %c0_2 = arith.constant 0 : index
    %c0_3 = arith.constant 0 : index
    %c0_4 = arith.constant 0 : index
    %c0_5 = arith.constant 0 : index
    %3 = vector.load %arg3[%c0_2, %c0_3, %c0_4, %c0_5] : memref<1x1x16x6xbf16, #tpu.memory_space<vmem>>, vector<1x1x16x6xbf16>
    %4 = vector.shape_cast %3 : vector<1x1x16x6xbf16> to vector<16x6xbf16>
    %5 = arith.extf %4 : vector<16x6xbf16> to vector<16x6xf32>
    %cst = arith.constant 0.000000e+00 : f32
    %6 = vector.broadcast %cst : f32 to vector<16x128xf32>
    %7 = arith.cmpf ogt, %2, %6 : vector<16x128xf32>
    %cst_6 = arith.constant 2.000000e-01 : f32
    %8 = vector.broadcast %cst_6 : f32 to vector<16x128xf32>
    %9 = arith.mulf %8, %2 : vector<16x128xf32>
    %10 = arith.select %7, %2, %9 : vector<16x128xi1>, vector<16x128xf32>
    %c0_7 = arith.constant 0 : index
    %c0_8 = arith.constant 0 : index
    %11 = vector.load %arg9[%c0_7, %c0_8] : memref<48x128xf32, #tpu.memory_space<vmem>>, vector<16x128xf32>
    tpu.vector_store %arg9[%c0_7, %c0_8], %10 {strides = array<i32>} : memref<48x128xf32, #tpu.memory_space<vmem>>, vector<16x128xf32>,
    %12 = vector.extract_strided_slice %2 {offsets = [0, 3], sizes = [16, 125], strides = [1, 1]} : vector<16x128xf32> to vector<16x125xf32>
    %cst_9 = arith.constant 0.000000e+00 : f32
    %13 = vector.broadcast %cst_9 : f32 to vector<16x125xf32>
    %14 = arith.cmpf ogt, %12, %13 : vector<16x125xf32>
    %cst_10 = arith.constant 2.000000e-01 : f32
    %15 = vector.broadcast %cst_10 : f32 to vector<16x125xf32>
    %16 = arith.mulf %15, %12 : vector<16x125xf32>
    %17 = arith.select %14, %12, %16 : vector<16x125xi1>, vector<16x125xf32>
    %c16 = arith.constant 16 : index
    %c0_11 = arith.constant 0 : index
    %18 = vector.load %arg9[%c16, %c0_11] : memref<48x128xf32, #tpu.memory_space<vmem>>, vector<16x125xf32>
    tpu.vector_store %arg9[%c16, %c0_11], %17 {strides = array<i32>} : memref<48x128xf32, #tpu.memory_space<vmem>>, vector<16x125xf32>,
    %19 = vector.extract_strided_slice %5 {offsets = [0, 0], sizes = [16, 3], strides = [1, 1]} : vector<16x6xf32> to vector<16x3xf32>
    %cst_12 = arith.constant 0.000000e+00 : f32
    %20 = vector.broadcast %cst_12 : f32 to vector<16x3xf32>
    %21 = arith.cmpf ogt, %19, %20 : vector<16x3xf32>
    %cst_13 = arith.constant 2.000000e-01 : f32
    %22 = vector.broadcast %cst_13 : f32 to vector<16x3xf32>
    %23 = arith.mulf %22, %19 : vector<16x3xf32>
    %24 = arith.select %21, %19, %23 : vector<16x3xi1>, vector<16x3xf32>
    %c16_14 = arith.constant 16 : index
    %c125 = arith.constant 125 : index
    %25 = vector.load %arg9[%c16_14, %c125] : memref<48x128xf32, #tpu.memory_space<vmem>>, vector<16x3xf32>
    tpu.vector_store %arg9[%c16_14, %c125], %24 {strides = array<i32>} : memref<48x128xf32, #tpu.memory_space<vmem>>, vector<16x3xf32>,
    %26 = vector.extract_strided_slice %2 {offsets = [0, 6], sizes = [16, 122], strides = [1, 1]} : vector<16x128xf32> to vector<16x122xf32>
    %cst_15 = arith.constant 0.000000e+00 : f32
    %27 = vector.broadcast %cst_15 : f32 to vector<16x122xf32>
    %28 = arith.cmpf ogt, %26, %27 : vector<16x122xf32>
    %cst_16 = arith.constant 2.000000e-01 : f32
    %29 = vector.broadcast %cst_16 : f32 to vector<16x122xf32>
    %30 = arith.mulf %29, %26 : vector<16x122xf32>
    %31 = arith.select %28, %26, %30 : vector<16x122xi1>, vector<16x122xf32>
    %c32 = arith.constant 32 : index
    %c0_17 = arith.constant 0 : index
    %32 = vector.load %arg9[%c32, %c0_17] : memref<48x128xf32, #tpu.memory_space<vmem>>, vector<16x122xf32>
    tpu.vector_store %arg9[%c32, %c0_17], %31 {strides = array<i32>} : memref<48x128xf32, #tpu.memory_space<vmem>>, vector<16x122xf32>,
    %cst_18 = arith.constant 0.000000e+00 : f32
    %33 = vector.broadcast %cst_18 : f32 to vector<16x6xf32>
    %34 = arith.cmpf ogt, %5, %33 : vector<16x6xf32>
    %cst_19 = arith.constant 2.000000e-01 : f32
    %35 = vector.broadcast %cst_19 : f32 to vector<16x6xf32>
    %36 = arith.mulf %35, %5 : vector<16x6xf32>
    %37 = arith.select %34, %5, %36 : vector<16x6xi1>, vector<16x6xf32>
    %c32_20 = arith.constant 32 : index
    %c122 = arith.constant 122 : index
    %38 = vector.load %arg9[%c32_20, %c122] : memref<48x128xf32, #tpu.memory_space<vmem>>, vector<16x6xf32>
    tpu.vector_store %arg9[%c32_20, %c122], %37 {strides = array<i32>} : memref<48x128xf32, #tpu.memory_space<vmem>>, vector<16x6xf32>,
    %c0_21 = arith.constant 0 : index
    %c0_22 = arith.constant 0 : index
    %39 = vector.load %arg4[%c0_21, %c0_22] : memref<16x48xbf16, #tpu.memory_space<vmem>>, vector<16x48xbf16>
    %c0_23 = arith.constant 0 : index
    %c0_24 = arith.constant 0 : index
    %40 = vector.load %arg9[%c0_23, %c0_24] : memref<48x128xf32, #tpu.memory_space<vmem>>, vector<48x128xf32>
    %41 = arith.truncf %40 : vector<48x128xf32> to vector<48x128xbf16>
    %cst_25 = arith.constant dense<0.000000e+00> : vector<16x128xf32>
    %42 = tpu.matmul %39, %41, %cst_25 {dimension_numbers = #tpu.dot_dimension_numbers<[1], [0], [0], [1], [0, 0, 1, 1], [], []>} : vector<16x48xbf16>, vector<48x128xbf16>, vector<16x128xf32> -> vector<16x128xf32>
    %c0_26 = arith.constant 0 : index
    %c0_27 = arith.constant 0 : index
    %43 = vector.load %arg5[%c0_26, %c0_27] : memref<16x1xf32, #tpu.memory_space<vmem>>, vector<16x1xf32>
    %44 = vector.broadcast %43 : vector<16x1xf32> to vector<16x128xf32>
    %45 = arith.addf %42, %44 : vector<16x128xf32>
    %cst_28 = arith.constant 0.000000e+00 : f32
    %46 = vector.broadcast %cst_28 : f32 to vector<16x128xf32>
    %47 = arith.cmpf ogt, %45, %46 : vector<16x128xf32>
    %cst_29 = arith.constant 2.000000e-01 : f32
    %48 = vector.broadcast %cst_29 : f32 to vector<16x128xf32>
    %49 = arith.mulf %48, %45 : vector<16x128xf32>
    %50 = arith.select %47, %45, %49 : vector<16x128xi1>, vector<16x128xf32>
    %51 = vector.extract_strided_slice %2 {offsets = [0, 3], sizes = [16, 125], strides = [1, 1]} : vector<16x128xf32> to vector<16x125xf32>
    %c0_30 = arith.constant 0 : index
    %c0_31 = arith.constant 0 : index
    %52 = vector.load %arg10[%c0_30, %c0_31] : memref<32x128xf32, #tpu.memory_space<vmem>>, vector<16x125xf32>
    tpu.vector_store %arg10[%c0_30, %c0_31], %51 {strides = array<i32>} : memref<32x128xf32, #tpu.memory_space<vmem>>, vector<16x125xf32>,
    %53 = vector.extract_strided_slice %5 {offsets = [0, 0], sizes = [16, 3], strides = [1, 1]} : vector<16x6xf32> to vector<16x3xf32>
    %c0_32 = arith.constant 0 : index
    %c125_33 = arith.constant 125 : index
    %54 = vector.load %arg10[%c0_32, %c125_33] : memref<32x128xf32, #tpu.memory_space<vmem>>, vector<16x3xf32>
    tpu.vector_store %arg10[%c0_32, %c125_33], %53 {strides = array<i32>} : memref<32x128xf32, #tpu.memory_space<vmem>>, vector<16x3xf32>,
    %c16_34 = arith.constant 16 : index
    %c0_35 = arith.constant 0 : index
    %55 = vector.load %arg10[%c16_34, %c0_35] : memref<32x128xf32, #tpu.memory_space<vmem>>, vector<16x128xf32>
    tpu.vector_store %arg10[%c16_34, %c0_35], %50 {strides = array<i32>} : memref<32x128xf32, #tpu.memory_space<vmem>>, vector<16x128xf32>,
    %c0_36 = arith.constant 0 : index
    %c0_37 = arith.constant 0 : index
    %56 = vector.load %arg6[%c0_36, %c0_37] : memref<16x32xbf16, #tpu.memory_space<vmem>>, vector<16x32xbf16>
    %c0_38 = arith.constant 0 : index
    %c0_39 = arith.constant 0 : index
    %57 = vector.load %arg10[%c0_38, %c0_39] : memref<32x128xf32, #tpu.memory_space<vmem>>, vector<32x128xf32>
    %58 = arith.truncf %57 : vector<32x128xf32> to vector<32x128xbf16>
    %cst_40 = arith.constant dense<0.000000e+00> : vector<16x128xf32>
    %59 = tpu.matmul %56, %58, %cst_40 {dimension_numbers = #tpu.dot_dimension_numbers<[1], [0], [0], [1], [0, 0, 1, 1], [], []>} : vector<16x32xbf16>, vector<32x128xbf16>, vector<16x128xf32> -> vector<16x128xf32>
    %c0_41 = arith.constant 0 : index
    %c0_42 = arith.constant 0 : index
    %60 = vector.load %arg7[%c0_41, %c0_42] : memref<16x1xf32, #tpu.memory_space<vmem>>, vector<16x1xf32>
    %61 = vector.broadcast %60 : vector<16x1xf32> to vector<16x128xf32>
    %62 = arith.addf %59, %61 : vector<16x128xf32>
    %c0_43 = arith.constant 0 : index
    %c0_44 = arith.constant 0 : index
    %c0_45 = arith.constant 0 : index
    %63 = vector.load %arg8[%c0_43, %c0_44, %c0_45] : memref<1x16x128xf32, #tpu.memory_space<vmem>>, vector<1x16x128xf32>
    %64 = vector.shape_cast %63 : vector<1x16x128xf32> to vector<16x128xf32>
    %65 = vector.shape_cast %62 : vector<16x128xf32> to vector<1x16x128xf32>
    tpu.vector_store %arg8[%c0_43, %c0_44, %c0_45], %65 {strides = array<i32>} : memref<1x16x128xf32, #tpu.memory_space<vmem>>, vector<1x16x128xf32>,
    return
  }
  func.func @transform_0(%arg0: i32, %arg1: i32) -> (i32, i32, i32) {
    %c0_i32 = arith.constant 0 : i32
    %c0_i32_0 = arith.constant 0 : i32
    return %arg0, %c0_i32, %arg1 : i32, i32, i32
  }
  func.func @transform_1(%arg0: i32, %arg1: i32) -> (i32, i32, i32, i32) {
    %c0_i32 = arith.constant 0 : i32
    %c0_i32_0 = arith.constant 0 : i32
    %c0_i32_1 = arith.constant 0 : i32
    return %arg0, %arg1, %c0_i32, %c0_i32_0 : i32, i32, i32, i32
  }
  func.func @transform_2(%arg0: i32, %arg1: i32) -> (i32, i32) {
    %c0_i32 = arith.constant 0 : i32
    %c0_i32_0 = arith.constant 0 : i32
    %c0_i32_1 = arith.constant 0 : i32
    return %c0_i32, %c0_i32_0 : i32, i32
  }
  func.func @transform_3(%arg0: i32, %arg1: i32) -> (i32, i32) {
    %c0_i32 = arith.constant 0 : i32
    %c0_i32_0 = arith.constant 0 : i32
    %c0_i32_1 = arith.constant 0 : i32
    return %c0_i32, %c0_i32_0 : i32, i32
  }
  func.func @transform_4(%arg0: i32, %arg1: i32) -> (i32, i32) {
    %c0_i32 = arith.constant 0 : i32
    %c0_i32_0 = arith.constant 0 : i32
    %c0_i32_1 = arith.constant 0 : i32
    return %c0_i32, %c0_i32_0 : i32, i32
  }
  func.func @transform_5(%arg0: i32, %arg1: i32) -> (i32, i32) {
    %c0_i32 = arith.constant 0 : i32
    %c0_i32_0 = arith.constant 0 : i32
    %c0_i32_1 = arith.constant 0 : i32
    return %c0_i32, %c0_i32_0 : i32, i32
  }
  func.func @transform_6(%arg0: i32, %arg1: i32) -> (i32, i32, i32) {
    %c0_i32 = arith.constant 0 : i32
    %c0_i32_0 = arith.constant 0 : i32
    return %arg0, %c0_i32, %arg1 : i32, i32, i32
  }
}

</mosaic_0001>

<llo_original>
// kernel: tpu_custom_call.1
$region0: #{tpu_custom_call.1}
  #allocation0 [shape = 'u32[]', space=smem, size = 0x4, offset = 0x4, fixed_abs, tag = 'smem constant byte address 0x4 - core index']
  #allocation1 [shape = 'u32[144,128]{1,0:T(1,128)}', space=vmem, size = 0x12000, scoped, tag = 'internal scratch']
  #allocation2 [shape = 'f32[48,128]{1,0:T(8,128)}', space=vmem, size = 0x6000, scoped, tag = 'scratch operand']
  #allocation3 [shape = 'f32[32,128]{1,0:T(8,128)}', space=vmem, size = 0x4000, scoped, tag = 'scratch operand']
  %s0 = inlined_call_operand.vmem [shape: bf16[2,16,256], index: 0, kind: input, shape index: {}]
  %s1 = inlined_call_operand.vmem [shape: bf16[2,2,16,6], index: 1, kind: input, shape index: {}]
  %s2 = inlined_call_operand.vmem [shape: bf16[16,48], index: 2, kind: input, shape index: {}]
  %s3 = inlined_call_operand.vmem [shape: f32[16,1], index: 3, kind: input, shape index: {}]
  %s4 = inlined_call_operand.vmem [shape: bf16[16,32], index: 4, kind: input, shape index: {}]
  %s5 = inlined_call_operand.vmem [shape: f32[16,1], index: 5, kind: input, shape index: {}]
  %s6 = inlined_call_operand.hbm [shape: f32[2,16,256], index: 6, kind: output, shape index: {}]
  %s7 = sld [smem:[#allocation0]]
  $region98: #{tpu_custom_call.1} parent=0
    _
  %s9 = ssub.s32 1, %s7
  %s10 = scalar_select 0, %s9, %s7
  $region1: #{tpu_custom_call.1} parent=0
    #allocation4 [shape = 'u8[8192]{0}', space=vmem, size = 0x2000, scoped, tag = 'input window, operand 0']
    #allocation5 [shape = 'u8[16384]{0}', space=vmem, size = 0x4000, scoped, tag = 'output window, operand 0']
    #allocation6 [shape = 's32[2]{0}', space=sflag, size = 0x8, scoped, tag = 'scoped memory for tpu_custom_call.1']
    %11 = vsyncpa [#allocation6], 0
    %s12 = scalar_lea.sflag [#allocation6], 1
    %13 = vsyncpa %s12, 0
    loop: start=0, step=1, limit=6
    $region2: #{tpu_custom_call.1} parent=1 // loop_pre_header
      _
    $region3: #{tpu_custom_call.1} parent=1 // loop_header
      %s15 = sphi 0, %s19
      %p16 = scmp.ge.s32.totalorder %s15, 6
      %s22 = sphi 0, %s34
      %s23 = sphi 0, %s30
      %s24 = sphi 0, %s22
      %s25 = sphi 0, %s23
      %s26 = sphi 0, %s24
      %s27 = sphi 0, %s25
      %s39 = sphi 0, %s41
      %s42 = sphi 0, %s39
      %s43 = sphi 0, %s42
      %s59 = sphi 0, %s43
      %s67 = sphi 0, %s69
      %s70 = sphi 0, %s67
      %s71 = sphi 0, %s70
      %s87 = sphi 0, %s71
      %s91 = sphi 0, %s91
      %s93 = sphi 0, %s91
      %s94 = sphi 0, %s93
      %s108 = sphi 0, %s94
      %s112 = sphi 0, %s112
      %s114 = sphi 0, %s112
      %s115 = sphi 0, %s114
      %s129 = sphi 0, %s115
      %s133 = sphi 0, %s133
      %s135 = sphi 0, %s133
      %s136 = sphi 0, %s135
      %s150 = sphi 0, %s136
      %s154 = sphi 0, %s154
      %s156 = sphi 0, %s154
      %s157 = sphi 0, %s156
      %s171 = sphi 0, %s157
      %s179 = sphi 0, %s181
      %s182 = sphi 0, %s179
      %s183 = sphi 0, %s182
      %s199 = sphi 0, %s183
    $region4: #{tpu_custom_call.1} parent=1 // loop_header_branch
      %18 = sbr.rel (%p16) target = $region8
    $region5: #{tpu_custom_call.1} parent=1 // loop_body
      %s20 = ssub.s32 %s15, 1
      %s21 = ssub.s32 %s15, 2
      %s28 = sadd.s32 1, %s23
      %p29 = scmp.ge.s32.totalorder %s28, 2
      %s30 = scalar_select %p29, 0, %s28
      %s31 = sadd.s32 1, %s22
      %s32 = scalar_select %p29, %s31, %s22
      %p33 = scmp.ge.s32.totalorder %s32, 2
      %s34 = scalar_select %p33, 0, %s32
      %s35 = ssub.s32 %s22, %s34
      %s36 = ssub.s32 %s23, %s30
      %s37 = sor.u32 %s35, %s36
      %p38 = scmp.eq.s32.totalorder %s37, 0
      %s40 = sadd.s32 %s39, 1
      %s41 = scalar_select %p38, %s39, %s40
      %p44 = pneg %p38
      %p45 = scmp.eq.s32.totalorder %s15, 3
      %p46 = por %p44, %p45
      %p47 = scmp.ne.s32.totalorder %s39, %s42
      %p48 = scmp.eq.s32.totalorder %s15, 0
      %p49 = por %p47, %p48
      %p50 = scmp.ne.s32.totalorder %s39, %s42
      %p51 = scmp.eq.s32.totalorder %s20, 3
      %p52 = por %p50, %p51
      %p53 = scmp.ne.s32.totalorder %s42, %s43
      %p54 = scmp.eq.s32.totalorder %s20, 0
      %p55 = por %p53, %p54
      %p56 = scmp.ne.s32.totalorder %s42, %s43
      %p57 = scmp.eq.s32.totalorder %s21, 3
      %p58 = por %p56, %p57
      %p60 = scmp.ne.s32.totalorder %s43, %s59
      %p61 = scmp.eq.s32.totalorder %s21, 0
      %p62 = por %p60, %p61
      %s63 = ssub.s32 %s22, %s34
      %s64 = ssub.s32 %s23, %s30
      %s65 = sor.u32 %s63, %s64
      %p66 = scmp.eq.s32.totalorder %s65, 0
      %s68 = sadd.s32 %s67, 1
      %s69 = scalar_select %p66, %s67, %s68
      %p72 = pneg %p66
      %p73 = scmp.eq.s32.totalorder %s15, 3
      %p74 = por %p72, %p73
      %p75 = scmp.ne.s32.totalorder %s67, %s70
      %p76 = scmp.eq.s32.totalorder %s15, 0
      %p77 = por %p75, %p76
      %p78 = scmp.ne.s32.totalorder %s67, %s70
      %p79 = scmp.eq.s32.totalorder %s20, 3
      %p80 = por %p78, %p79
      %p81 = scmp.ne.s32.totalorder %s70, %s71
      %p82 = scmp.eq.s32.totalorder %s20, 0
      %p83 = por %p81, %p82
      %p84 = scmp.ne.s32.totalorder %s70, %s71
      %p85 = scmp.eq.s32.totalorder %s21, 3
      %p86 = por %p84, %p85
      %p88 = scmp.ne.s32.totalorder %s71, %s87
      %p89 = scmp.eq.s32.totalorder %s21, 0
      %p90 = por %p88, %p89
      %s92 = sadd.s32 %s91, 1
      %p95 = scmp.eq.s32.totalorder %s15, 3
      %p96 = scmp.ne.s32.totalorder %s91, %s93
      %p97 = scmp.eq.s32.totalorder %s15, 0
      %p98 = por %p96, %p97
      %p99 = scmp.ne.s32.totalorder %s91, %s93
      %p100 = scmp.eq.s32.totalorder %s20, 3
      %p101 = por %p99, %p100
      %p102 = scmp.ne.s32.totalorder %s93, %s94
      %p103 = scmp.eq.s32.totalorder %s20, 0
      %p104 = por %p102, %p103
      %p105 = scmp.ne.s32.totalorder %s93, %s94
      %p106 = scmp.eq.s32.totalorder %s21, 3
      %p107 = por %p105, %p106
      %p109 = scmp.ne.s32.totalorder %s94, %s108
      %p110 = scmp.eq.s32.totalorder %s21, 0
      %p111 = por %p109, %p110
      %s113 = sadd.s32 %s112, 1
      %p116 = scmp.eq.s32.totalorder %s15, 3
      %p117 = scmp.ne.s32.totalorder %s112, %s114
      %p118 = scmp.eq.s32.totalorder %s15, 0
      %p119 = por %p117, %p118
      %p120 = scmp.ne.s32.totalorder %s112, %s114
      %p121 = scmp.eq.s32.totalorder %s20, 3
      %p122 = por %p120, %p121
      %p123 = scmp.ne.s32.totalorder %s114, %s115
      %p124 = scmp.eq.s32.totalorder %s20, 0
      %p125 = por %p123, %p124
      %p126 = scmp.ne.s32.totalorder %s114, %s115
      %p127 = scmp.eq.s32.totalorder %s21, 3
      %p128 = por %p126, %p127
      %p130 = scmp.ne.s32.totalorder %s115, %s129
      %p131 = scmp.eq.s32.totalorder %s21, 0
      %p132 = por %p130, %p131
      %s134 = sadd.s32 %s133, 1
      %p137 = scmp.eq.s32.totalorder %s15, 3
      %p138 = scmp.ne.s32.totalorder %s133, %s135
      %p139 = scmp.eq.s32.totalorder %s15, 0
      %p140 = por %p138, %p139
      %p141 = scmp.ne.s32.totalorder %s133, %s135
      %p142 = scmp.eq.s32.totalorder %s20, 3
      %p143 = por %p141, %p142
      %p144 = scmp.ne.s32.totalorder %s135, %s136
      %p145 = scmp.eq.s32.totalorder %s20, 0
      %p146 = por %p144, %p145
      %p147 = scmp.ne.s32.totalorder %s135, %s136
      %p148 = scmp.eq.s32.totalorder %s21, 3
      %p149 = por %p147, %p148
      %p151 = scmp.ne.s32.totalorder %s136, %s150
      %p152 = scmp.eq.s32.totalorder %s21, 0
      %p153 = por %p151, %p152
      %s155 = sadd.s32 %s154, 1
      %p158 = scmp.eq.s32.totalorder %s15, 3
      %p159 = scmp.ne.s32.totalorder %s154, %s156
      %p160 = scmp.eq.s32.totalorder %s15, 0
      %p161 = por %p159, %p160
      %p162 = scmp.ne.s32.totalorder %s154, %s156
      %p163 = scmp.eq.s32.totalorder %s20, 3
      %p164 = por %p162, %p163
      %p165 = scmp.ne.s32.totalorder %s156, %s157
      %p166 = scmp.eq.s32.totalorder %s20, 0
      %p167 = por %p165, %p166
      %p168 = scmp.ne.s32.totalorder %s156, %s157
      %p169 = scmp.eq.s32.totalorder %s21, 3
      %p170 = por %p168, %p169
      %p172 = scmp.ne.s32.totalorder %s157, %s171
      %p173 = scmp.eq.s32.totalorder %s21, 0
      %p174 = por %p172, %p173
      %s175 = ssub.s32 %s22, %s34
      %s176 = ssub.s32 %s23, %s30
      %s177 = sor.u32 %s175, %s176
      %p178 = scmp.eq.s32.totalorder %s177, 0
      %s180 = sadd.s32 %s179, 1
      %s181 = scalar_select %p178, %s179, %s180
      %p184 = pneg %p178
      %p185 = scmp.eq.s32.totalorder %s15, 3
      %p186 = por %p184, %p185
      %p187 = scmp.ne.s32.totalorder %s179, %s182
      %p188 = scmp.eq.s32.totalorder %s15, 0
      %p189 = por %p187, %p188
      %p190 = scmp.ne.s32.totalorder %s179, %s182
      %p191 = scmp.eq.s32.totalorder %s20, 3
      %p192 = por %p190, %p191
      %p193 = scmp.ne.s32.totalorder %s182, %s183
      %p194 = scmp.eq.s32.totalorder %s20, 0
      %p195 = por %p193, %p194
      %p196 = scmp.ne.s32.totalorder %s182, %s183
      %p197 = scmp.eq.s32.totalorder %s21, 3
      %p198 = por %p196, %p197
      %p200 = scmp.ne.s32.totalorder %s183, %s199
      %p201 = scmp.eq.s32.totalorder %s21, 0
      %p202 = por %p200, %p201
      %p203 = scmp.le.s32.totalorder 1, %s15
      %p204 = scmp.lt.s32.totalorder %s15, 5
      %p205 = pnand %p203, %p204
      %p206 = pneg %p205
      // Predicated region
      $region9: #{tpu_custom_call.1} parent=5 // pred_check
        _
      $region10: #{tpu_custom_call.1} parent=5 // pred_check_branch
        %208 = sbr.rel (%p205) target = $region12
      $region11: #{tpu_custom_call.1} parent=5 // pred_region
        %s209 = ssub.s32 %s15, 1
        // Predicated region
        $region13: #{tpu_custom_call.1} parent=11 // pred_check
          %p210 = pneg %p104
        $region14: #{tpu_custom_call.1} parent=11 // pred_check_branch
          %212 = sbr.rel (%p210) target = $region16
        $region15: #{tpu_custom_call.1} parent=11 // pred_region
          _
        $region16: #{tpu_custom_call.1} parent=11 // pred_fallthru
          _
        // Predicated region
        $region17: #{tpu_custom_call.1} parent=11 // pred_check
          %p213 = pneg %p125
        $region18: #{tpu_custom_call.1} parent=11 // pred_check_branch
          %215 = sbr.rel (%p213) target = $region20
        $region19: #{tpu_custom_call.1} parent=11 // pred_region
          _
        $region20: #{tpu_custom_call.1} parent=11 // pred_fallthru
          _
        // Predicated region
        $region21: #{tpu_custom_call.1} parent=11 // pred_check
          %p216 = pneg %p146
        $region22: #{tpu_custom_call.1} parent=11 // pred_check_branch
          %218 = sbr.rel (%p216) target = $region24
        $region23: #{tpu_custom_call.1} parent=11 // pred_region
          _
        $region24: #{tpu_custom_call.1} parent=11 // pred_fallthru
          _
        // Predicated region
        $region25: #{tpu_custom_call.1} parent=11 // pred_check
          %p219 = pneg %p167
        $region26: #{tpu_custom_call.1} parent=11 // pred_check_branch
          %221 = sbr.rel (%p219) target = $region28
        $region27: #{tpu_custom_call.1} parent=11 // pred_region
          _
        $region28: #{tpu_custom_call.1} parent=11 // pred_fallthru
          _
      $region12: #{tpu_custom_call.1} parent=5 // pred_fallthru
        _
      %p222 = scmp.lt.s32.totalorder %s15, 4
      // Predicated region
      $region29: #{tpu_custom_call.1} parent=5 // pred_check
        %p223 = pneg %p222
      $region30: #{tpu_custom_call.1} parent=5 // pred_check_branch
        %225 = sbr.rel (%p223) target = $region32
      $region31: #{tpu_custom_call.1} parent=5 // pred_region
        // Predicated region
        $region33: #{tpu_custom_call.1} parent=31 // pred_check
          %p226 = pneg %p49
        $region34: #{tpu_custom_call.1} parent=31 // pred_check_branch
          %228 = sbr.rel (%p226) target = $region36
        $region35: #{tpu_custom_call.1} parent=31 // pred_region
          %s229 = sand.u32 %s39, 1
          %s230 = sand.u32 %s39, 1
          %s231 = smul.addr %s230, 8
          %s232 = scalar_lea.vmem [#allocation4], %s231
          %s233 = smul.addr %s22, 4
          %s234 = sadd.s32 %s23, %s233
          %s235 = smul.addr %s234, 4
          %s236 = scalar_lea.vmem %s0, %s235
          // Predicated region
          $region37: #{tpu_custom_call.1} parent=35 // pred_check
            _
          $region38: #{tpu_custom_call.1} parent=35 // pred_check_branch
            %238 = sbr.rel (0) target = $region40
          $region39: #{tpu_custom_call.1} parent=35 // pred_region
            // Predicated region
            $region41: #{tpu_custom_call.1} parent=39 // pred_check
              _
            $region42: #{tpu_custom_call.1} parent=39 // pred_check_branch
              %240 = sbr.rel target = $region44
            $region43: #{tpu_custom_call.1} parent=39 // pred_region
              // Predicated region
              $region56: #{tpu_custom_call.1} parent=43 // pred_check
                _
              $region57: #{tpu_custom_call.1} parent=43 // pred_check_branch
                %258 = sbr.rel (0) target = $region59
              $region58: #{tpu_custom_call.1} parent=43 // pred_region
                loop: start=0, step=1, limit=1
                $region60: #{tpu_custom_call.1} parent=58 // loop_pre_header
                  _
                $region61: #{tpu_custom_call.1} parent=58 // loop_header
                  %s260 = sphi 0, %s264
                  %p261 = scmp.ge.s32.totalorder %s260, 1
                  %s265 = sphi %s236, %s236
                  %s266 = sphi %s232, %s232
                $region62: #{tpu_custom_call.1} parent=58 // loop_header_branch
                  %263 = sbr.rel (%p261) target = $region66
                $region63: #{tpu_custom_call.1} parent=58 // loop_body
                  _
                $region64: #{tpu_custom_call.1} parent=58 // loop_footer
                  %s264 = sadd.s32 1, %s260
                $region65: #{tpu_custom_call.1} parent=58 // loop_footer_branch
                  %259 = sbr.rel target = $region61
                $region66: #{tpu_custom_call.1} parent=58 // loop_exit
                  _
                %s268 = ssub.s32 16, 1
                loop: start=0, step=1, limit=1
                $region67: #{tpu_custom_call.1} parent=58 // loop_pre_header
                  _
                $region68: #{tpu_custom_call.1} parent=58 // loop_header
                  %s270 = sphi 0, %s274
                  %p271 = scmp.ge.s32.totalorder %s270, 1
                  %s275 = sphi %s236, %s236
                  %s276 = sphi %s232, %s232
                $region69: #{tpu_custom_call.1} parent=58 // loop_header_branch
                  %273 = sbr.rel (%p271) target = $region73
                $region70: #{tpu_custom_call.1} parent=58 // loop_body
                  %v277 = vld [vmem:[%s275] sm:%s268]
                  %278 = vst [vmem:[%s276] sm:%s268] %v277
                  %v279 = vld [vmem:[%s275 + $0x8] sm:%s268]
                  %280 = vst [vmem:[%s276 + $0x4] sm:%s268] %v279
                $region71: #{tpu_custom_call.1} parent=58 // loop_footer
                  %s274 = sadd.s32 1, %s270
                $region72: #{tpu_custom_call.1} parent=58 // loop_footer_branch
                  %269 = sbr.rel target = $region68
                $region73: #{tpu_custom_call.1} parent=58 // loop_exit
                  _
              $region59: #{tpu_custom_call.1} parent=43 // pred_fallthru
                _
            $region44: #{tpu_custom_call.1} parent=39 // pred_fallthru
              _
            // Predicated region
            $region45: #{tpu_custom_call.1} parent=39 // pred_check
              _
            $region46: #{tpu_custom_call.1} parent=39 // pred_check_branch
              %242 = sbr.rel (0) target = $region48
            $region47: #{tpu_custom_call.1} parent=39 // pred_region
              %s244 = ssub.s32 16, 1
              loop: start=0, step=1, limit=1
              $region49: #{tpu_custom_call.1} parent=47 // loop_pre_header
                _
              $region50: #{tpu_custom_call.1} parent=47 // loop_header
                %s246 = sphi 0, %s250
                %p247 = scmp.ge.s32.totalorder %s246, 1
                %s251 = sphi %s236, %s236
                %s252 = sphi %s232, %s232
              $region51: #{tpu_custom_call.1} parent=47 // loop_header_branch
                %249 = sbr.rel (%p247) target = $region55
              $region52: #{tpu_custom_call.1} parent=47 // loop_body
                %v253 = vld [vmem:[%s251] sm:%s244]
                %254 = vst [vmem:[%s252] sm:%s244] %v253
                %v255 = vld [vmem:[%s251 + $0x8] sm:%s244]
                %256 = vst [vmem:[%s252 + $0x4] sm:%s244] %v255
              $region53: #{tpu_custom_call.1} parent=47 // loop_footer
                %s250 = sadd.s32 1, %s246
              $region54: #{tpu_custom_call.1} parent=47 // loop_footer_branch
                %245 = sbr.rel target = $region50
              $region55: #{tpu_custom_call.1} parent=47 // loop_exit
                _
            $region48: #{tpu_custom_call.1} parent=39 // pred_fallthru
              _
          $region40: #{tpu_custom_call.1} parent=35 // pred_fallthru
            _
          %281 = vnop
        $region36: #{tpu_custom_call.1} parent=31 // pred_fallthru
          _
        // Predicated region
        $region74: #{tpu_custom_call.1} parent=31 // pred_check
          %p282 = pneg %p77
        $region75: #{tpu_custom_call.1} parent=31 // pred_check_branch
          %284 = sbr.rel (%p282) target = $region77
        $region76: #{tpu_custom_call.1} parent=31 // pred_region
          %p285 = scmp.lt.s32.totalorder %s22, 1
          %s286 = scalar_select %p285, %s22, 1
          %p287 = scmp.lt.s32.totalorder %s23, 1
          %s288 = scalar_select %p287, %s23, 1
          %s289 = smul.addr %s288, 2
          %s290 = smul.addr %s286, 4
          %s291 = sadd.s32 %s289, %s290
          %s292 = smul.addr %s291, 4
          %s293 = scalar_lea.vmem %s1, %s292
        $region77: #{tpu_custom_call.1} parent=31 // pred_fallthru
          _
      $region32: #{tpu_custom_call.1} parent=5 // pred_fallthru
        _
      %p294 = scmp.le.s32.totalorder 1, %s15
      %p295 = scmp.lt.s32.totalorder %s15, 5
      %p296 = pnand %p294, %p295
      %p297 = pneg %p296
      // Predicated region
      $region78: #{tpu_custom_call.1} parent=5 // pred_check
        _
      $region79: #{tpu_custom_call.1} parent=5 // pred_check_branch
        %299 = sbr.rel (%p296) target = $region81
      $region80: #{tpu_custom_call.1} parent=5 // pred_region
        %s300 = ssub.s32 %s15, 1
        %s301 = sand.u32 %s42, 1
        %s302 = sand.u32 %s42, 1
        %s303 = smul.addr %s302, 8
        %s304 = scalar_lea.vmem [#allocation4], %s303
        // Predicated region
        $region82: #{tpu_custom_call.1} parent=80 // pred_check
          %p305 = pneg %p55
        $region83: #{tpu_custom_call.1} parent=80 // pred_check_branch
          %307 = sbr.rel (%p305) target = $region85
        $region84: #{tpu_custom_call.1} parent=80 // pred_region
          _
        $region85: #{tpu_custom_call.1} parent=80 // pred_fallthru
          _
        %s308 = sand.u32 %s42, 1
        %s309 = sand.u32 %s42, 1
        %s310 = smul.addr %s309, 8
        %s311 = scalar_lea.vmem [#allocation4], %s310
        %p312 = pneg %p55
        %p313 = pneg %p52
        %p314 = scmp.lt.s32.totalorder %s24, 1
        %s315 = scalar_select %p314, %s24, 1
        %p316 = scmp.lt.s32.totalorder %s25, 1
        %s317 = scalar_select %p316, %s25, 1
        %s318 = smul.addr %s317, 2
        %s319 = smul.addr %s315, 4
        %s320 = sadd.s32 %s318, %s319
        %s321 = smul.addr %s320, 4
        %s322 = scalar_lea.vmem %s1, %s321
        %p323 = pneg %p83
        %p324 = pneg %p80
        %p325 = pneg %p104
        %p326 = pneg %p101
        %p327 = pneg %p125
        %p328 = pneg %p122
        %p329 = pneg %p146
        %p330 = pneg %p143
        %p331 = pneg %p167
        %p332 = pneg %p164
        %p333 = pneg %p195
        %p334 = pneg %p192
        %s335 = sand.u32 %s182, 1
        %s336 = scalar_lea.sflag [#allocation6], %s335
        %s337 = sand.u32 %s182, 1
        %s338 = smul.addr %s337, 16
        %s339 = scalar_lea.vmem [#allocation5], %s338
        %p340 = scmp.lt.s32.totalorder %s24, 1
        %s341 = scalar_select %p340, %s24, 1
        %p342 = scmp.lt.s32.totalorder %s25, 1
        %s343 = scalar_select %p342, %s25, 1
        %s344 = smul.addr %s343, 2
        %s345 = smul.addr %s341, 4
        %s346 = sadd.s32 %s344, %s345
        %s347 = smul.addr %s346, 4
        %s348 = scalar_lea.vmem %s1, %s347
        %v350 = vld [vmem:[%s304] sm:$0xf]
        %v351 = vld [vmem:[%s304 + $0x4] sm:$0xf]
        %v352 = vunpack.c.l.bf16 %v350
        %v353 = vunpack.c.l.bf16 %v351
        %v354 = vld [vmem:[%s348] sm:$0xf]
        %v355 = vld [vmem:[%s348 + $0x4] sm:$0xf]
        %v356 = vunpack.c.l.bf16 %v354
        %v357 = vunpack.c.l.bf16 %v355
        %vm358 = vcmp.gt.f32.partialorder %v352, 0.0
        %vm359 = vcmp.gt.f32.partialorder %v353, 0.0
        %v360 = vmul.f32 %v352, 0.2
        %v361 = vmul.f32 %v353, 0.2
        %v362 = vsel %vm358, %v352, %v360
        %v363 = vsel %vm359, %v353, %v361
        %364 = vst [vmem:[#allocation2] sm:$0xff] %v362
        %365 = vst [vmem:[#allocation2 + $0x8] sm:$0xff] %v363
        %368 = vrot.lane.b32.xlu0 %v362, 125
        %v369 = vpop.permute.xlu0 %368
        %370 = vrot.lane.b32.xlu0 %v363, 125
        %v371 = vpop.permute.xlu0 %370
        %vm374 = vcmask 1022976
        %375 = vst.msk [vmem:[#allocation2 + $0x10] sm:$0xff] %vm374, %v369
        %376 = vst.msk [vmem:[#allocation2 + $0x18] sm:$0xff] %vm374, %v371
        %vm377 = vcmp.gt.f32.partialorder %v356, 0.0
        %vm378 = vcmp.gt.f32.partialorder %v357, 0.0
        %v379 = vmul.f32 %v356, 0.2
        %v380 = vmul.f32 %v357, 0.2
        %v381 = vsel %vm377, %v356, %v379
        %v382 = vsel %vm378, %v357, %v380
        %385 = vrot.lane.b32.xlu0 %v381, 125
        %v386 = vpop.permute.xlu0 %385
        %387 = vrot.lane.b32.xlu0 %v382, 125
        %v388 = vpop.permute.xlu0 %387
        %vm391 = vcmask 1048552
        %392 = vst.msk [vmem:[#allocation2 + $0x10] sm:$0xff] %vm391, %v386
        %393 = vst.msk [vmem:[#allocation2 + $0x18] sm:$0xff] %vm391, %v388
        %394 = vrot.lane.b32.xlu0 %v362, 122
        %v395 = vpop.permute.xlu0 %394
        %396 = vrot.lane.b32.xlu0 %v363, 122
        %v397 = vpop.permute.xlu0 %396
        %vm400 = vcmask 998400
        %401 = vst.msk [vmem:[#allocation2 + $0x20] sm:$0xff] %vm400, %v395
        %402 = vst.msk [vmem:[#allocation2 + $0x28] sm:$0xff] %vm400, %v397
        %403 = vrot.lane.b32.xlu0 %v381, 122
        %v404 = vpop.permute.xlu0 %403
        %405 = vrot.lane.b32.xlu0 %v382, 122
        %v406 = vpop.permute.xlu0 %405
        %vm409 = vcmask 1048528
        %410 = vst.msk [vmem:[#allocation2 + $0x20] sm:$0xff] %vm409, %v404
        %411 = vst.msk [vmem:[#allocation2 + $0x28] sm:$0xff] %vm409, %v406
        %v412 = vld [vmem:[%s2] sm:$0xf]
        %v413 = vld [vmem:[%s2 + $0x4] sm:$0xf]
        %v414 = vld [vmem:[#allocation2] sm:$0xff]
        %v415 = vld [vmem:[#allocation2 + $0x8] sm:$0xff]
        %v416 = vld [vmem:[#allocation2 + $0x10] sm:$0xff]
        %v417 = vld [vmem:[#allocation2 + $0x18] sm:$0xff]
        %v418 = vld [vmem:[#allocation2 + $0x20] sm:$0xff]
        %v419 = vld [vmem:[#allocation2 + $0x28] sm:$0xff]
        %v420 = vpack.c.bf16 %v415, %v414
        %v421 = vpack.c.bf16 %v417, %v416
        %v422 = vpack.c.bf16 %v419, %v418
        %v423 = vld [vmem:[%s3] sm:$0xff]
        %v424 = vld [vmem:[%s3 + $0x8] sm:$0xff]
        %426 = vset.pattern.permute.xlu0 0
        %427 = vperm.xlu0 %426, %v423
        %v428 = vpop.permute.xlu0 %427
        %431 = vset.pattern.permute.xlu0 0
        %432 = vperm.xlu0 %431, %v424
        %v433 = vpop.permute.xlu0 %432
        %v437 = vunpack.c.l.b16 %v412
        %v438 = vunpack.c.l.b16 %v413
        %v439 = vpack.c.b16 %v438, %v437
        %vm440 = vcmask 392192
        %v442 = vsel %vm440, %v439, 0
        %444 = vmatprep.subr.bf16.mxu0 0
        %445 = vmatpush1.bf16.msra.mxu0 0
        %446 = vmatprep.subr.bf16.mxu0 0
        %447 = vmatpush1.bf16.msra.mxu0 0
        %448 = vmatprep.subr.bf16.mxu0 0
        %449 = vmatpush1.bf16.msra.mxu0 0
        %450 = vmatprep.subr.bf16.mxu0 0
        %451 = vmatpush1.bf16.msra.mxu0 0
        %452 = vmatprep.subr.bf16.mxu0 0
        %453 = vmatpush1.bf16.msra.mxu0 0
        %454 = vmatprep.subr.bf16.mxu0 0
        %455 = vmatpush1.bf16.msra.mxu0 %v422
        %456 = vmatprep.subr.bf16.mxu0 0
        %457 = vmatpush1.bf16.msra.mxu0 %v421
        %458 = vmatprep.subr.bf16.mxu0 0
        %459 = vmatpush1.bf16.msra.mxu0 %v420
        %460 = vmatprep.subr.bf16.mxu0 0
        %461 = vmatpush2.bf16.msra.mxu0 0
        %462 = vmatprep.subr.bf16.mxu0 0
        %463 = vmatpush2.bf16.msra.mxu0 0
        %464 = vmatprep.subr.bf16.mxu0 0
        %465 = vmatpush2.bf16.msra.mxu0 0
        %466 = vmatprep.subr.bf16.mxu0 0
        %467 = vmatpush2.bf16.msra.mxu0 0
        %468 = vmatprep.subr.bf16.mxu0 0
        %469 = vmatpush2.bf16.msra.mxu0 0
        %470 = vmatprep.subr.bf16.mxu0 0
        %471 = vmatpush2.bf16.msra.mxu0 0
        %472 = vmatprep.subr.bf16.mxu0 0
        %473 = vmatpush2.bf16.msra.mxu0 0
        %474 = vmatprep.subr.bf16.mxu0 0
        %475 = vmatpush2.bf16.msra.mxu0 0
        %476 = vmatprep.mubr.bf16.mxu0 0
        %477 = vmatmul.mubr.bf16.gmra.mxu0 %v442
        %v478 = vpop.f32.mrf.mxu0
        %v479 = vadd.f32 %v428, %v478
        %v480 = vpop.f32.mrf.mxu0
        %v481 = vpop.f32.mrf.mxu0
        %v482 = vadd.f32 %v433, %v481
        %v483 = vpop.f32.mrf.mxu0
        %484 = vdwg.mxu0
        %vm485 = vcmp.gt.f32.partialorder %v479, 0.0
        %vm486 = vcmp.gt.f32.partialorder %v482, 0.0
        %v487 = vmul.f32 %v479, 0.2
        %v488 = vmul.f32 %v482, 0.2
        %v489 = vsel %vm485, %v479, %v487
        %v490 = vsel %vm486, %v482, %v488
        %493 = vrot.lane.b32.xlu0 %v352, 125
        %v494 = vpop.permute.xlu0 %493
        %495 = vrot.lane.b32.xlu0 %v353, 125
        %v496 = vpop.permute.xlu0 %495
        %499 = vst.msk [vmem:[#allocation3] sm:$0xff] %vm374, %v494
        %500 = vst.msk [vmem:[#allocation3 + $0x8] sm:$0xff] %vm374, %v496
        %503 = vrot.lane.b32.xlu0 %v356, 125
        %v504 = vpop.permute.xlu0 %503
        %505 = vrot.lane.b32.xlu0 %v357, 125
        %v506 = vpop.permute.xlu0 %505
        %509 = vst.msk [vmem:[#allocation3] sm:$0xff] %vm391, %v504
        %510 = vst.msk [vmem:[#allocation3 + $0x8] sm:$0xff] %vm391, %v506
        %511 = vst [vmem:[#allocation3 + $0x10] sm:$0xff] %v489
        %512 = vst [vmem:[#allocation3 + $0x18] sm:$0xff] %v490
        %v513 = vld [vmem:[%s4] sm:$0xf]
        %v514 = vld [vmem:[%s4 + $0x4] sm:$0xf]
        %v515 = vld [vmem:[#allocation3] sm:$0xff]
        %v516 = vld [vmem:[#allocation3 + $0x8] sm:$0xff]
        %v517 = vld [vmem:[#allocation3 + $0x10] sm:$0xff]
        %v518 = vld [vmem:[#allocation3 + $0x18] sm:$0xff]
        %v519 = vpack.c.bf16 %v516, %v515
        %v520 = vpack.c.bf16 %v518, %v517
        %v521 = vld [vmem:[%s5] sm:$0xff]
        %v522 = vld [vmem:[%s5 + $0x8] sm:$0xff]
        %524 = vset.pattern.permute.xlu0 0
        %525 = vperm.xlu0 %524, %v521
        %v526 = vpop.permute.xlu0 %525
        %529 = vset.pattern.permute.xlu0 0
        %530 = vperm.xlu0 %529, %v522
        %v531 = vpop.permute.xlu0 %530
        %v535 = vunpack.c.l.b16 %v513
        %v536 = vunpack.c.l.b16 %v514
        %v537 = vpack.c.b16 %v536, %v535
        %vm538 = vcmask 261120
        %v540 = vsel %vm538, %v537, 0
        %542 = vmatprep.subr.bf16.mxu0 0
        %543 = vmatpush1.bf16.msra.mxu0 0
        %544 = vmatprep.subr.bf16.mxu0 0
        %545 = vmatpush1.bf16.msra.mxu0 0
        %546 = vmatprep.subr.bf16.mxu0 0
        %547 = vmatpush1.bf16.msra.mxu0 0
        %548 = vmatprep.subr.bf16.mxu0 0
        %549 = vmatpush1.bf16.msra.mxu0 0
        %550 = vmatprep.subr.bf16.mxu0 0
        %551 = vmatpush1.bf16.msra.mxu0 0
        %552 = vmatprep.subr.bf16.mxu0 0
        %553 = vmatpush1.bf16.msra.mxu0 0
        %554 = vmatprep.subr.bf16.mxu0 0
        %555 = vmatpush1.bf16.msra.mxu0 %v520
        %556 = vmatprep.subr.bf16.mxu0 0
        %557 = vmatpush1.bf16.msra.mxu0 %v519
        %558 = vmatprep.subr.bf16.mxu0 0
        %559 = vmatpush2.bf16.msra.mxu0 0
        %560 = vmatprep.subr.bf16.mxu0 0
        %561 = vmatpush2.bf16.msra.mxu0 0
        %562 = vmatprep.subr.bf16.mxu0 0
        %563 = vmatpush2.bf16.msra.mxu0 0
        %564 = vmatprep.subr.bf16.mxu0 0
        %565 = vmatpush2.bf16.msra.mxu0 0
        %566 = vmatprep.subr.bf16.mxu0 0
        %567 = vmatpush2.bf16.msra.mxu0 0
        %568 = vmatprep.subr.bf16.mxu0 0
        %569 = vmatpush2.bf16.msra.mxu0 0
        %570 = vmatprep.subr.bf16.mxu0 0
        %571 = vmatpush2.bf16.msra.mxu0 0
        %572 = vmatprep.subr.bf16.mxu0 0
        %573 = vmatpush2.bf16.msra.mxu0 0
        %574 = vmatprep.mubr.bf16.mxu0 0
        %575 = vmatmul.mubr.bf16.gmra.mxu0 %v540
        %v576 = vpop.f32.mrf.mxu0
        %v577 = vadd.f32 %v526, %v576
        %v578 = vpop.f32.mrf.mxu0
        %v579 = vpop.f32.mrf.mxu0
        %v580 = vadd.f32 %v531, %v579
        %v581 = vpop.f32.mrf.mxu0
        %582 = vdwg.mxu0
        %583 = vst [vmem:[%s339] sm:$0xff] %v577
        %584 = vst [vmem:[%s339 + $0x8] sm:$0xff] %v580
        %s585 = sand.u32 %s182, 1
        %s586 = scalar_lea.sflag [#allocation6], %s585
        %s587 = sand.u32 %s182, 1
        %s588 = smul.addr %s587, 16
        %s589 = scalar_lea.vmem [#allocation5], %s588
        // Predicated region
        $region86: #{tpu_custom_call.1} parent=80 // pred_check
          %p590 = pneg %p192
        $region87: #{tpu_custom_call.1} parent=80 // pred_check_branch
          %592 = sbr.rel (%p590) target = $region89
        $region88: #{tpu_custom_call.1} parent=80 // pred_region
          %s594 = ssub.s32 256, 256
          %595 = vsyncadd %s586, %s594
          %s596 = smul.addr %s24, 4
          %s597 = sadd.s32 %s25, %s596
          %s598 = smul.addr %s597, 128
          %s599 = scalar_lea.hbm %s6, %s598
          %s600 = sshll.u32 %s589, 4
          %s601 = int_to_ptr.vmem [resolvable:$true] %s600
          %606 = dma.vmem_to_hbm [thread:$0]  %s601, 256, %s599, %s586, 128, 256, 8
        $region89: #{tpu_custom_call.1} parent=80 // pred_fallthru
          _
      $region81: #{tpu_custom_call.1} parent=5 // pred_fallthru
        _
      %p607 = scmp.le.s32.totalorder 2, %s15
      // Predicated region
      $region90: #{tpu_custom_call.1} parent=5 // pred_check
        %p608 = pneg %p607
      $region91: #{tpu_custom_call.1} parent=5 // pred_check_branch
        %610 = sbr.rel (%p608) target = $region93
      $region92: #{tpu_custom_call.1} parent=5 // pred_region
        %s611 = ssub.s32 %s15, 2
        // Predicated region
        $region94: #{tpu_custom_call.1} parent=92 // pred_check
          %p612 = pneg %p198
        $region95: #{tpu_custom_call.1} parent=92 // pred_check_branch
          %614 = sbr.rel (%p612) target = $region97
        $region96: #{tpu_custom_call.1} parent=92 // pred_region
          %s615 = sand.u32 %s183, 1
          %s616 = scalar_lea.sflag [#allocation6], %s615
          %s617 = sand.u32 %s183, 1
          %s618 = smul.addr %s617, 16
          %s619 = scalar_lea.vmem [#allocation5], %s618
          %620 = dma.done %s616, 256
        $region97: #{tpu_custom_call.1} parent=92 // pred_fallthru
          _
      $region93: #{tpu_custom_call.1} parent=5 // pred_fallthru
        _
    $region6: #{tpu_custom_call.1} parent=1 // loop_footer
      %s19 = sadd.s32 1, %s15
    $region7: #{tpu_custom_call.1} parent=1 // loop_footer_branch
      %14 = sbr.rel target = $region3
    $region8: #{tpu_custom_call.1} parent=1 // loop_exit
      _
    %621 = vsyncpa [#allocation6], 1
    %s622 = scalar_lea.sflag [#allocation6], 1
    %623 = vsyncpa %s622, 1

</llo_original>
